<compile_context>
chip_gen: v5e
topology: v5e:2x2
jax: 0.10.0
libtpu: 0.0.40
codegen_flags: <defaults>
</compile_context>

<pallas_src>
import jax
import jax.numpy as jnp
from jax.experimental import pallas as pl
from jax.experimental.pallas import tpu as pltpu

_LANE_CANDIDATES = (2048, 1024, 512, 256, 128)  # lane-dense last-dim choices
_DEFAULT_LANES = 2048
# Below this many bytes, skip the kernel entirely (jnp fast path).
# TODO(synk): raise to ~1-2 MiB in production; kept low so the small demo
# inputs still exercise the Pallas kernel.
_MIN_KERNEL_BYTES = 4 * 1024


def _tile_config():
    """Returns (tile_bytes, vmem_limit_bytes) for the current TPU generation."""
    try:
        kind = jax.devices()[0].device_kind.lower()
    except Exception:  # pragma: no cover - defensive; fall back to safe config
        kind = ""
    if "v7" in kind:
        # 8 MiB tiles: 6 double-buffered slots = 48 MiB < 64 MiB physical VMEM,
        # but above the 32 MiB scoped default, so raise the limit.
        return 8 << 20, 56 << 20
    # v5e / v6e: 4 MiB tiles -> 24 MiB of pipeline buffers.  v5e's scoped-VMEM
    # default is only 16 MiB, so explicitly allow 32 MiB (both have 128 MiB
    # physical VMEM).
    return 4 << 20, 32 << 20


def _sublane_pack(itemsize):
    """Rows per sublane-packed vreg tile for this element size."""
    return {4: 8, 2: 16, 1: 32}.get(itemsize, 8)


def _mix_kernel(lam_ref, a_ref, b_ref, o_ref):
    """o = b + lam * (a - b)  ==  lam * a + (1 - lam) * b   (elementwise)."""
    lam = lam_ref[0]
    a = a_ref[...]
    b = b_ref[...]
    o_ref[...] = (b + lam * (a - b)).astype(o_ref.dtype)


def _mix_slab(lam_arr, a2, b2, tile_bytes, vmem_limit):
    """Tiled, pipelined lerp over a lane-dense (rows, lanes) slab."""
    rows, lanes = a2.shape
    itemsize = a2.dtype.itemsize
    pack = _sublane_pack(itemsize)
    # Largest tile (in rows) that keeps one block near tile_bytes, rounded to
    # the sublane pack so the (8,128)/(16,128)/(32,128) constraint holds.
    tm_cap = max(pack, (tile_bytes // (lanes * itemsize)) // pack * pack)
    tm = rows if rows <= tm_cap else tm_cap
    grid = (pl.cdiv(rows, tm),)  # un-padded; Pallas masks the boundary block

    return pl.pallas_call(
        _mix_kernel,
        out_shape=jax.ShapeDtypeStruct((rows, lanes), a2.dtype),
        grid_spec=pltpu.PrefetchScalarGridSpec(
            num_scalar_prefetch=1,
            grid=grid,
            in_specs=[
                pl.BlockSpec((tm, lanes), lambda i, lam: (i, 0)),
                pl.BlockSpec((tm, lanes), lambda i, lam: (i, 0)),
            ],
            out_specs=pl.BlockSpec((tm, lanes), lambda i, lam: (i, 0)),
        ),
        compiler_params=pltpu.CompilerParams(
            dimension_semantics=("parallel",),
            vmem_limit_bytes=vmem_limit,
        ),
    )(lam_arr, a2, b2)


def _mix(lam_scalar, a, b):
    """Elementwise lam*a + (1-lam)*b with a lane-dense Pallas kernel."""
    assert a.shape == b.shape and a.dtype == b.dtype
    orig_shape = a.shape
    n = a.size
    itemsize = a.dtype.itemsize
    lam = jnp.asarray(lam_scalar, dtype=jnp.float32)

    # Small-input fast path: XLA's fused lerp is already at roofline and the
    # pallas_call launch + pipeline prologue would dominate.
    if n * itemsize < _MIN_KERNEL_BYTES:
        return (b + lam.astype(a.dtype) * (a - b)).astype(a.dtype)

    tile_bytes, vmem_limit = _tile_config()
    lam_arr = lam.reshape(1)
    a_flat = jnp.ravel(a)
    b_flat = jnp.ravel(b)

    # Prefer a lane-dense factorization with no tail: no pad / slice copies.
    lanes = next((c for c in _LANE_CANDIDATES if n % c == 0), None)
    if lanes is not None:
        out2 = _mix_slab(
            lam_arr,
            a_flat.reshape(n // lanes, lanes),
            b_flat.reshape(n // lanes, lanes),
            tile_bytes,
            vmem_limit,
        )
        return out2.reshape(orig_shape)

    # n is not a multiple of 128: run the kernel on the 2048-aligned bulk and
    # handle the (<2048-element) tail in plain jnp.  No full-tensor padding.
    bulk = (n // _DEFAULT_LANES) * _DEFAULT_LANES
    if bulk == 0:
        return (b + lam.astype(a.dtype) * (a - b)).astype(a.dtype)
    out_bulk = _mix_slab(
        lam_arr,
        a_flat[:bulk].reshape(bulk // _DEFAULT_LANES, _DEFAULT_LANES),
        b_flat[:bulk].reshape(bulk // _DEFAULT_LANES, _DEFAULT_LANES),
        tile_bytes,
        vmem_limit,
    )
    tail = (b_flat[bulk:] + lam.astype(a.dtype) * (a_flat[bulk:] - b_flat[bulk:]))
    return jnp.concatenate([out_bulk.reshape(-1), tail.astype(a.dtype)]).reshape(orig_shape)


class MixUp:
    """JAX/Pallas equivalent of the PyTorch MixUp module."""

    def __init__(self, alpha=0.75):
        self.alpha = alpha

    def __call__(self, key, x1_data, x1_labels, x2_data, x2_labels):
        # lambda_prelim ~ Beta(alpha, alpha); lambda' = max(l, 1 - l)
        lam_prelim = jax.random.beta(key, self.alpha, self.alpha)
        lam_prime = jnp.maximum(lam_prelim, 1.0 - lam_prelim).astype(jnp.float32)

        # Big data tensors: Pallas kernel (HBM-bandwidth bound, lane-dense, tiled).
        x_prime = _mix(lam_prime, x1_data, x2_data)

        # Tiny label tensors: plain jnp; a dedicated kernel launch would be pure
        # fixed overhead and XLA fuses this trivially.
        p_prime = (x2_labels + lam_prime * (x1_labels - x2_labels)).astype(x1_labels.dtype)
        return x_prime, p_prime


if __name__ == "__main__":
    key = jax.random.PRNGKey(0)
    k_lam, k1, k2, k3, k4 = jax.random.split(key, 5)

    batch, channels, spatial, num_classes = 2, 4, 16, 10

    x1_data = jax.random.normal(k1, (batch, channels, spatial, spatial), dtype=jnp.float32)
    x2_data = jax.random.normal(k2, (batch, channels, spatial, spatial), dtype=jnp.float32)
    x1_labels = jax.nn.softmax(
        jax.random.normal(k3, (batch, num_classes), dtype=jnp.float32), axis=-1)
    x2_labels = jax.nn.softmax(
        jax.random.normal(k4, (batch, num_classes), dtype=jnp.float32), axis=-1)

    mixup = MixUp(alpha=0.75)
    x_prime, p_prime = mixup(k_lam, x1_data, x1_labels, x2_data, x2_labels)
    jax.block_until_ready((x_prime, p_prime))

    # Correctness check against a pure-JAX reference (same lambda draw).
    lam = jax.random.beta(k_lam, 0.75, 0.75)
    lam = jnp.maximum(lam, 1.0 - lam)
    ref_x = lam * x1_data + (1.0 - lam) * x2_data
    ref_p = lam * x1_labels + (1.0 - lam) * x2_labels
    assert jnp.allclose(x_prime, ref_x, atol=1e-5), "data mix mismatch"
    assert jnp.allclose(p_prime, ref_p, atol=1e-5), "label mix mismatch"

    # Extra coverage: size not a multiple of 2048 (adaptive lanes -> 128).
    y1 = jax.random.normal(k1, (2, 3, 24, 24), dtype=jnp.float32)   # 3456 elems
    y2 = jax.random.normal(k2, (2, 3, 24, 24), dtype=jnp.float32)
    y_mix = _mix(lam, y1, y2)
    jax.block_until_ready(y_mix)
    assert jnp.allclose(y_mix, lam * y1 + (1.0 - lam) * y2, atol=1e-5), "adaptive-lane mismatch"

    # Extra coverage: size not a multiple of 128 (bulk kernel + jnp tail).
    z1 = jax.random.normal(k3, (5, 5, 17, 17), dtype=jnp.float32)   # 7225 elems
    z2 = jax.random.normal(k4, (5, 5, 17, 17), dtype=jnp.float32)
    z_mix = _mix(lam, z1, z2)
    jax.block_until_ready(z_mix)
    assert jnp.allclose(z_mix, lam * z1 + (1.0 - lam) * z2, atol=1e-5), "bulk+tail mismatch"

    print("KERNEL_OK")
</pallas_src>

<mosaic_0001>
module attributes {stable_mosaic.version = 11 : i64} {
  func.func @_mix_kernel(%arg0: i32, %arg1: memref<1xf32, #tpu.memory_space<smem>>, %arg2: memref<1x2048xf32, #tpu.memory_space<vmem>>, %arg3: memref<1x2048xf32, #tpu.memory_space<vmem>>, %arg4: memref<1x2048xf32, #tpu.memory_space<vmem>>) attributes {dimension_semantics = [#tpu.dimension_semantics<parallel>], iteration_bounds = array<i64: 1>, scalar_prefetch = 1 : i64, scratch_operands = 0 : i64, tpu.core_type = #tpu.core_type<tc>, window_params = [{transform_indices = @transform_0, window_bounds = array<i64: 1, 2048>}, {transform_indices = @transform_1, window_bounds = array<i64: 1, 2048>}, {transform_indices = @transform_2, window_bounds = array<i64: 1, 2048>}]} {
    %c0 = arith.constant 0 : index
    %0 = memref.load %arg1[%c0] : memref<1xf32, #tpu.memory_space<smem>>
    %c0_0 = arith.constant 0 : index
    %c0_1 = arith.constant 0 : index
    %1 = vector.load %arg2[%c0_0, %c0_1] : memref<1x2048xf32, #tpu.memory_space<vmem>>, vector<1x2048xf32>
    %c0_2 = arith.constant 0 : index
    %c0_3 = arith.constant 0 : index
    %2 = vector.load %arg3[%c0_2, %c0_3] : memref<1x2048xf32, #tpu.memory_space<vmem>>, vector<1x2048xf32>
    %3 = arith.subf %1, %2 : vector<1x2048xf32>
    %4 = vector.broadcast %0 : f32 to vector<1x2048xf32>
    %5 = arith.mulf %4, %3 : vector<1x2048xf32>
    %6 = arith.addf %2, %5 : vector<1x2048xf32>
    %c0_4 = arith.constant 0 : index
    %c0_5 = arith.constant 0 : index
    %7 = vector.load %arg4[%c0_4, %c0_5] : memref<1x2048xf32, #tpu.memory_space<vmem>>, vector<1x2048xf32>
    tpu.vector_store %arg4[%c0_4, %c0_5], %6 {strides = array<i32>} : memref<1x2048xf32, #tpu.memory_space<vmem>>, vector<1x2048xf32>,
    return
  }
  func.func @transform_0(%arg0: i32, %arg1: memref<1xf32, #tpu.memory_space<smem>>) -> (i32, i32) {
    %c0_i32 = arith.constant 0 : i32
    %c0_i32_0 = arith.constant 0 : i32
    return %arg0, %c0_i32 : i32, i32
  }
  func.func @transform_1(%arg0: i32, %arg1: memref<1xf32, #tpu.memory_space<smem>>) -> (i32, i32) {
    %c0_i32 = arith.constant 0 : i32
    %c0_i32_0 = arith.constant 0 : i32
    return %arg0, %c0_i32 : i32, i32
  }
  func.func @transform_2(%arg0: i32, %arg1: memref<1xf32, #tpu.memory_space<smem>>) -> (i32, i32) {
    %c0_i32 = arith.constant 0 : i32
    %c0_i32_0 = arith.constant 0 : i32
    return %arg0, %c0_i32 : i32, i32
  }
}

</mosaic_0001>

<llo_original>
// kernel: tpu_custom_call.1
$region0: #{tpu_custom_call.1}
  #allocation0 [shape = 'u32[]', space=smem, size = 0x4, offset = 0x4, fixed_abs, tag = 'smem constant byte address 0x4 - core index']
  #allocation1 [shape = 'u32[72,128]{1,0:T(1,128)}', space=vmem, size = 0x9000, scoped, tag = 'internal scratch']
  #allocation2 [shape = 's32[1]{0}', space=sflag, size = 0x4, scoped, tag = 'scoped memory for tpu_custom_call.1']
  #allocation3 [shape = 'f32[1]{0:T(128)S(6)}', space=smem, size = 0x200, scoped, tag = 'prefetched SMEM operand 0']
  %s0 = inlined_call_operand.<no memory space> [shape: f32[1], index: 0, kind: input, shape index: {}]
  %s1 = inlined_call_operand.hbm [shape: f32[1,2048], index: 1, kind: input, shape index: {}]
  %s2 = inlined_call_operand.hbm [shape: f32[1,2048], index: 2, kind: input, shape index: {}]
  %s3 = inlined_call_operand.hbm [shape: f32[1,2048], index: 3, kind: output, shape index: {}]
  %s4 = sld [smem:[#allocation0]]
  $region26: #{tpu_custom_call.1} parent=0
    _
  %s6 = ssub.s32 1, %s4
  %s7 = scalar_select 0, %s6, %s4
  %8 = sst [smem:[#allocation3]] %s0
  $region1: #{tpu_custom_call.1} parent=0
    #allocation4 [shape = 'u8[8192]{0}', space=vmem, size = 0x2000, scoped, tag = 'input window, operand 1, single buffered']
    #allocation5 [shape = 's32[1]{0}', space=sflag, size = 0x4, scoped, tag = 'scoped memory for tpu_custom_call.1']
    #allocation6 [shape = 's32[1]{0}', space=sflag, size = 0x4, scoped, tag = 'scoped memory for tpu_custom_call.1']
    #allocation7 [shape = 'u8[8192]{0}', space=vmem, size = 0x2000, scoped, tag = 'input window, operand 2, single buffered']
    #allocation8 [shape = 's32[1]{0}', space=sflag, size = 0x4, scoped, tag = 'scoped memory for tpu_custom_call.1']
    #allocation9 [shape = 'u8[8192]{0}', space=vmem, size = 0x2000, scoped, tag = 'output window, operand 0, single buffered']
    %9 = vsyncpa [#allocation5], 0
    %10 = vsyncpa [#allocation8], 0
    %11 = vsyncpa [#allocation6], 0
    // Predicated region
    $region2: #{tpu_custom_call.1} parent=1 // pred_check
      _
    $region3: #{tpu_custom_call.1} parent=1 // pred_check_branch
      %13 = sbr.rel (0) target = $region5
    $region4: #{tpu_custom_call.1} parent=1 // pred_region
      %15 = vsyncadd [#allocation5], 0
      %s17 = sshll.u32 %s1, 4
      %s18 = int_to_ptr.hbm [resolvable:$true] %s17
      %s19 = sshll.u32 [#allocation4], 4
      %s20 = int_to_ptr.vmem [resolvable:$true] %s19
      %22 = dma.hbm_to_vmem [thread:$0]  %s18, 256, %s20, [#allocation5]
    $region5: #{tpu_custom_call.1} parent=1 // pred_fallthru
      _
    // Predicated region
    $region6: #{tpu_custom_call.1} parent=1 // pred_check
      _
    $region7: #{tpu_custom_call.1} parent=1 // pred_check_branch
      %24 = sbr.rel (0) target = $region9
    $region8: #{tpu_custom_call.1} parent=1 // pred_region
      %26 = vsyncadd [#allocation8], 0
      %s28 = sshll.u32 %s2, 4
      %s29 = int_to_ptr.hbm [resolvable:$true] %s28
      %s30 = sshll.u32 [#allocation7], 4
      %s31 = int_to_ptr.vmem [resolvable:$true] %s30
      %33 = dma.hbm_to_vmem [thread:$0]  %s29, 256, %s31, [#allocation8]
    $region9: #{tpu_custom_call.1} parent=1 // pred_fallthru
      _
    // Predicated region
    $region10: #{tpu_custom_call.1} parent=1 // pred_check
      _
    $region11: #{tpu_custom_call.1} parent=1 // pred_check_branch
      %35 = sbr.rel (0) target = $region13
    $region12: #{tpu_custom_call.1} parent=1 // pred_region
      %37 = dma.done [#allocation5], 256
    $region13: #{tpu_custom_call.1} parent=1 // pred_fallthru
      _
    // Predicated region
    $region14: #{tpu_custom_call.1} parent=1 // pred_check
      _
    $region15: #{tpu_custom_call.1} parent=1 // pred_check_branch
      %39 = sbr.rel (0) target = $region17
    $region16: #{tpu_custom_call.1} parent=1 // pred_region
      %41 = dma.done [#allocation8], 256
    $region17: #{tpu_custom_call.1} parent=1 // pred_fallthru
      _
    %s42 = sld [smem:[#allocation3]]
    %v43 = vld [vmem:[#allocation4] sm:$0xff]
    %v44 = vld [vmem:[#allocation4 + $0x8] sm:$0xff]
    %v45 = vld [vmem:[#allocation7] sm:$0xff]
    %v46 = vld [vmem:[#allocation7 + $0x8] sm:$0xff]
    %v47 = vsub.f32 %v43, %v45
    %v48 = vsub.f32 %v44, %v46
    %v49 = vstv %s42
    %v50 = vmul.f32 %v49, %v47
    %v51 = vmul.f32 %v49, %v48
    %v52 = vadd.f32 %v45, %v50
    %v53 = vadd.f32 %v46, %v51
    %54 = vst [vmem:[#allocation9] sm:$0xff] %v52
    %55 = vst [vmem:[#allocation9 + $0x8] sm:$0xff] %v53
    // Predicated region
    $region18: #{tpu_custom_call.1} parent=1 // pred_check
      _
    $region19: #{tpu_custom_call.1} parent=1 // pred_check_branch
      %57 = sbr.rel (0) target = $region21
    $region20: #{tpu_custom_call.1} parent=1 // pred_region
      %59 = vsyncadd [#allocation6], 0
      %s61 = sshll.u32 [#allocation9], 4
      %s62 = int_to_ptr.vmem [resolvable:$true] %s61
      %s63 = sshll.u32 %s3, 4
      %s64 = int_to_ptr.hbm [resolvable:$true] %s63
      %66 = dma.vmem_to_hbm [thread:$0]  %s62, 256, %s64, [#allocation6]
    $region21: #{tpu_custom_call.1} parent=1 // pred_fallthru
      _
    // Predicated region
    $region22: #{tpu_custom_call.1} parent=1 // pred_check
      _
    $region23: #{tpu_custom_call.1} parent=1 // pred_check_branch
      %68 = sbr.rel (0) target = $region25
    $region24: #{tpu_custom_call.1} parent=1 // pred_region
      %70 = dma.done [#allocation6], 256
    $region25: #{tpu_custom_call.1} parent=1 // pred_fallthru
      _
    %71 = vsyncpa [#allocation5], 1
    %72 = vsyncpa [#allocation8], 1
    %73 = vsyncpa [#allocation6], 1

</llo_original>
